<compile_context>
chip_gen: v7x
topology: tpu7x:2x2x1
jax: 0.10.0
libtpu: 0.0.40
codegen_flags: <defaults>
</compile_context>

<pallas_src>
import jax
import jax.numpy as jnp
from jax.experimental import pallas as pl
from jax.experimental.pallas import tpu as pltpu

LANE = 128
SUBLANE = 8


def _round_up(x, m):
    return ((x + m - 1) // m) * m


def mlp_kernel(xT_ref, w1_ref, b1_ref, w2_ref, b2_ref, w3_ref, b3_ref, o_ref):
    # fc1 + relu (feature-major: (64,in) @ (in,tile) -> (64,tile) f32 acc)
    h1 = jnp.dot(w1_ref[...], xT_ref[...], preferred_element_type=jnp.float32)
    h1 = jnp.maximum(h1 + b1_ref[...], 0.0)
    # fc2 + relu: (32,64) @ (64,tile) -> (32,tile)
    h2 = jnp.dot(w2_ref[...], h1.astype(w2_ref.dtype),
                 preferred_element_type=jnp.float32)
    h2 = jnp.maximum(h2 + b2_ref[...], 0.0)
    # fc3 (no activation): (out_pad,32) @ (32,tile) -> (out_pad,tile)
    out = jnp.dot(w3_ref[...], h2.astype(w3_ref.dtype),
                  preferred_element_type=jnp.float32)
    o_ref[...] = (out + b3_ref[...]).astype(o_ref.dtype)


def _vmem_estimate(tile, in_features, out_pad):
    """VMEM bytes with lane padding (minor dim -> 128) and sublane packing
    (f32: 8 rows, bf16: 16 rows) accounted for."""
    def slab(rows, cols, itemsize):
        sub = SUBLANE * (4 // itemsize)           # 8 rows for f32, 16 for bf16
        return _round_up(rows, sub) * _round_up(cols, LANE) * itemsize

    total = 0
    total += 2 * slab(in_features, tile, 2)       # x^T tile, double-buffered
    total += 2 * slab(out_pad, tile, 4)           # y^T tile, double-buffered
    total += 2 * (slab(64, in_features, 2) + slab(64, 1, 4)     # resident
                  + slab(32, 64, 2) + slab(32, 1, 4)            # weights/bias
                  + slab(out_pad, 32, 2) + slab(out_pad, 1, 4)) # (2 bufs each)
    total += slab(64, tile, 4) + slab(64, tile, 2)   # h1 f32 + bf16 copy
    total += slab(32, tile, 4) + slab(32, tile, 2)   # h2 f32 + bf16 copy
    total += slab(out_pad, tile, 4)                  # pre-store y^T f32
    return total


def policy_forward(x, params, *, tile_b=8192):
    """Fused 3-layer MLP, batch-on-lanes, single Pallas kernel.

    x: (batch, input_size) float32
    params: dict with w1 (in,64), b1 (1,64), w2 (64,32), b2 (1,32),
            w3 (32,out), b3 (1,out)  (stored as x @ W + b layout).
    Returns (batch, out_size) float32.
    """
    batch, in_features = x.shape
    out_size = params["w3"].shape[1]
    out_pad = _round_up(out_size, SUBLANE)        # sublane-dense output height

    # --- wrapper-side layout plumbing (transpose to feature-major) ----------
    w1T = params["w1"].T.astype(jnp.bfloat16)            # (64, in)
    w2T = params["w2"].T.astype(jnp.bfloat16)            # (32, 64)
    w3T = params["w3"].T                                  # (out, 32)
    b1 = params["b1"].reshape(-1, 1).astype(jnp.float32)  # (64, 1)
    b2 = params["b2"].reshape(-1, 1).astype(jnp.float32)  # (32, 1)
    b3 = params["b3"].reshape(-1, 1).astype(jnp.float32)  # (out, 1)
    if out_pad != out_size:
        w3T = jnp.pad(w3T, ((0, out_pad - out_size), (0, 0)))
        b3 = jnp.pad(b3, ((0, out_pad - out_size), (0, 0)))
    w3T = w3T.astype(jnp.bfloat16)

    xT = x.T.astype(jnp.bfloat16)                          # (in, batch): batch on lanes

    # --- batch (lane-axis) tiling -------------------------------------------
    tile = min(tile_b, _round_up(batch, LANE))
    tile = max(_round_up(tile, LANE), LANE)

    vmem_cap = 48 * 1024 * 1024                  # safe under v7x's 64 MiB VMEM
    slack = 2 * 1024 * 1024
    while tile > LANE and _vmem_estimate(tile, in_features, out_pad) + slack > vmem_cap:
        tile = _round_up(tile // 2, LANE)

    padded_batch = _round_up(batch, tile)
    if padded_batch != batch:
        xT = jnp.pad(xT, ((0, 0), (0, padded_batch - batch)))
    grid = (padded_batch // tile,)

    vmem_limit = int(min(max(_vmem_estimate(tile, in_features, out_pad) + slack,
                             16 * 1024 * 1024), vmem_cap))

    flops = 2 * padded_batch * (in_features * 64 + 64 * 32 + 32 * out_pad)
    bytes_accessed = (padded_batch * in_features * 2        # x^T (bf16)
                      + padded_batch * out_pad * 4          # y^T (f32)
                      + w1T.size * 2 + w2T.size * 2 + w3T.size * 2
                      + b1.size * 4 + b2.size * 4 + b3.size * 4)

    resident = lambda i: (0, 0)   # weights/biases: same block every grid step

    out_padded = pl.pallas_call(
        mlp_kernel,
        out_shape=jax.ShapeDtypeStruct((out_pad, padded_batch), jnp.float32),
        grid=grid,
        in_specs=[
            pl.BlockSpec((in_features, tile), lambda i: (0, i)),   # x^T streamed
            pl.BlockSpec(w1T.shape, resident),
            pl.BlockSpec(b1.shape, resident),
            pl.BlockSpec(w2T.shape, resident),
            pl.BlockSpec(b2.shape, resident),
            pl.BlockSpec(w3T.shape, resident),
            pl.BlockSpec(b3.shape, resident),
        ],
        out_specs=pl.BlockSpec((out_pad, tile), lambda i: (0, i)),
        compiler_params=pltpu.CompilerParams(
            dimension_semantics=("parallel",),
            vmem_limit_bytes=vmem_limit),
        cost_estimate=pl.CostEstimate(
            flops=flops, transcendentals=0, bytes_accessed=bytes_accessed),
    )(xT, w1T, b1, w2T, b2, w3T, b3)

    # slice off sublane/batch padding, back to (batch, out_size)
    return out_padded[:out_size, :batch].T


def init_params(key, input_size, output_size):
    """Deterministic init mimicking PyTorch nn.Linear defaults
    (uniform in [-1/sqrt(fan_in), 1/sqrt(fan_in)])."""
    dims = [(input_size, 64), (64, 32), (32, output_size)]
    params = {}
    for i, (fan_in, fan_out) in enumerate(dims, start=1):
        key, kw, kb = jax.random.split(key, 3)
        bound = 1.0 / jnp.sqrt(float(fan_in))
        # stored as (in, out): equivalent to torch weight (out, in) transposed
        params[f"w{i}"] = jax.random.uniform(
            kw, (fan_in, fan_out), jnp.float32, -bound, bound)
        params[f"b{i}"] = jax.random.uniform(
            kb, (1, fan_out), jnp.float32, -bound, bound)
    return params


def reference_forward(x, p):
    h1 = jnp.maximum(x @ p["w1"] + p["b1"], 0.0)
    h2 = jnp.maximum(h1 @ p["w2"] + p["b2"], 0.0)
    return h2 @ p["w3"] + p["b3"]


if __name__ == "__main__":
    input_size = 8    # LunarLander observation dim
    output_size = 4   # LunarLander action dim
    batch = 300       # not a multiple of 128, exercises lane-axis padding

    key = jax.random.PRNGKey(0)
    key, kx = jax.random.split(key)
    x = jax.random.normal(kx, (batch, input_size), jnp.float32)
    params = init_params(key, input_size, output_size)

    # tiny tile_b so the small test batch still exercises a multi-step grid
    out = policy_forward(x, params, tile_b=128)
    out = jax.block_until_ready(out)

    ref = reference_forward(x, params)
    assert out.shape == (batch, output_size)
    # bf16 weights / inputs with f32 accumulation: loose-ish tolerance
    assert jnp.allclose(out, ref, atol=3e-2, rtol=3e-2)

    print("KERNEL_OK")
</pallas_src>

<mosaic_0001>
module attributes {stable_mosaic.version = 11 : i64} {
  func.func @mlp_kernel(%arg0: i32, %arg1: memref<8x128xbf16, #tpu.memory_space<vmem>>, %arg2: memref<64x8xbf16, #tpu.memory_space<vmem>>, %arg3: memref<64x1xf32, #tpu.memory_space<vmem>>, %arg4: memref<32x64xbf16, #tpu.memory_space<vmem>>, %arg5: memref<32x1xf32, #tpu.memory_space<vmem>>, %arg6: memref<8x32xbf16, #tpu.memory_space<vmem>>, %arg7: memref<8x1xf32, #tpu.memory_space<vmem>>, %arg8: memref<8x128xf32, #tpu.memory_space<vmem>>) attributes {dimension_semantics = [#tpu.dimension_semantics<parallel>], iteration_bounds = array<i64: 3>, scalar_prefetch = 0 : i64, scratch_operands = 0 : i64, tpu.core_type = #tpu.core_type<tc>, window_params = [{transform_indices = @transform_0, window_bounds = array<i64: 8, 128>}, {pipeline_mode = #tpu.pipeline_mode<synchronous>, transform_indices = @transform_1, window_bounds = array<i64: 64, 8>}, {pipeline_mode = #tpu.pipeline_mode<synchronous>, transform_indices = @transform_2, window_bounds = array<i64: 64, 1>}, {pipeline_mode = #tpu.pipeline_mode<synchronous>, transform_indices = @transform_3, window_bounds = array<i64: 32, 64>}, {pipeline_mode = #tpu.pipeline_mode<synchronous>, transform_indices = @transform_4, window_bounds = array<i64: 32, 1>}, {pipeline_mode = #tpu.pipeline_mode<synchronous>, transform_indices = @transform_5, window_bounds = array<i64: 8, 32>}, {pipeline_mode = #tpu.pipeline_mode<synchronous>, transform_indices = @transform_6, window_bounds = array<i64: 8, 1>}, {transform_indices = @transform_7, window_bounds = array<i64: 8, 128>}]} {
    %c0 = arith.constant 0 : index
    %c0_0 = arith.constant 0 : index
    %0 = vector.load %arg2[%c0, %c0_0] : memref<64x8xbf16, #tpu.memory_space<vmem>>, vector<64x8xbf16>
    %c0_1 = arith.constant 0 : index
    %c0_2 = arith.constant 0 : index
    %1 = vector.load %arg1[%c0_1, %c0_2] : memref<8x128xbf16, #tpu.memory_space<vmem>>, vector<8x128xbf16>
    %cst = arith.constant dense<0.000000e+00> : vector<64x128xf32>
    %2 = tpu.matmul %0, %1, %cst {dimension_numbers = #tpu.dot_dimension_numbers<[1], [0], [0], [1], [0, 0, 1, 1], [], []>} : vector<64x8xbf16>, vector<8x128xbf16>, vector<64x128xf32> -> vector<64x128xf32>
    %c0_3 = arith.constant 0 : index
    %c0_4 = arith.constant 0 : index
    %3 = vector.load %arg3[%c0_3, %c0_4] : memref<64x1xf32, #tpu.memory_space<vmem>>, vector<64x1xf32>
    %4 = vector.broadcast %3 : vector<64x1xf32> to vector<64x128xf32>
    %5 = arith.addf %2, %4 : vector<64x128xf32>
    %cst_5 = arith.constant 0.000000e+00 : f32
    %6 = vector.broadcast %cst_5 : f32 to vector<64x128xf32>
    %7 = arith.maximumf %5, %6 : vector<64x128xf32>
    %c0_6 = arith.constant 0 : index
    %c0_7 = arith.constant 0 : index
    %8 = vector.load %arg4[%c0_6, %c0_7] : memref<32x64xbf16, #tpu.memory_space<vmem>>, vector<32x64xbf16>
    %9 = arith.truncf %7 : vector<64x128xf32> to vector<64x128xbf16>
    %cst_8 = arith.constant dense<0.000000e+00> : vector<32x128xf32>
    %10 = tpu.matmul %8, %9, %cst_8 {dimension_numbers = #tpu.dot_dimension_numbers<[1], [0], [0], [1], [0, 0, 1, 1], [], []>} : vector<32x64xbf16>, vector<64x128xbf16>, vector<32x128xf32> -> vector<32x128xf32>
    %c0_9 = arith.constant 0 : index
    %c0_10 = arith.constant 0 : index
    %11 = vector.load %arg5[%c0_9, %c0_10] : memref<32x1xf32, #tpu.memory_space<vmem>>, vector<32x1xf32>
    %12 = vector.broadcast %11 : vector<32x1xf32> to vector<32x128xf32>
    %13 = arith.addf %10, %12 : vector<32x128xf32>
    %cst_11 = arith.constant 0.000000e+00 : f32
    %14 = vector.broadcast %cst_11 : f32 to vector<32x128xf32>
    %15 = arith.maximumf %13, %14 : vector<32x128xf32>
    %c0_12 = arith.constant 0 : index
    %c0_13 = arith.constant 0 : index
    %16 = vector.load %arg6[%c0_12, %c0_13] : memref<8x32xbf16, #tpu.memory_space<vmem>>, vector<8x32xbf16>
    %17 = arith.truncf %15 : vector<32x128xf32> to vector<32x128xbf16>
    %cst_14 = arith.constant dense<0.000000e+00> : vector<8x128xf32>
    %18 = tpu.matmul %16, %17, %cst_14 {dimension_numbers = #tpu.dot_dimension_numbers<[1], [0], [0], [1], [0, 0, 1, 1], [], []>} : vector<8x32xbf16>, vector<32x128xbf16>, vector<8x128xf32> -> vector<8x128xf32>
    %c0_15 = arith.constant 0 : index
    %c0_16 = arith.constant 0 : index
    %19 = vector.load %arg7[%c0_15, %c0_16] : memref<8x1xf32, #tpu.memory_space<vmem>>, vector<8x1xf32>
    %20 = vector.broadcast %19 : vector<8x1xf32> to vector<8x128xf32>
    %21 = arith.addf %18, %20 : vector<8x128xf32>
    %c0_17 = arith.constant 0 : index
    %c0_18 = arith.constant 0 : index
    %22 = vector.load %arg8[%c0_17, %c0_18] : memref<8x128xf32, #tpu.memory_space<vmem>>, vector<8x128xf32>
    tpu.vector_store %arg8[%c0_17, %c0_18], %21 {strides = array<i32>} : memref<8x128xf32, #tpu.memory_space<vmem>>, vector<8x128xf32>,
    return
  }
  func.func @transform_0(%arg0: i32) -> (i32, i32) {
    %c0_i32 = arith.constant 0 : i32
    %c0_i32_0 = arith.constant 0 : i32
    return %c0_i32, %arg0 : i32, i32
  }
  func.func @transform_1(%arg0: i32) -> (i32, i32) {
    %c0_i32 = arith.constant 0 : i32
    %c0_i32_0 = arith.constant 0 : i32
    %c0_i32_1 = arith.constant 0 : i32
    return %c0_i32, %c0_i32_0 : i32, i32
  }
  func.func @transform_2(%arg0: i32) -> (i32, i32) {
    %c0_i32 = arith.constant 0 : i32
    %c0_i32_0 = arith.constant 0 : i32
    %c0_i32_1 = arith.constant 0 : i32
    return %c0_i32, %c0_i32_0 : i32, i32
  }
  func.func @transform_3(%arg0: i32) -> (i32, i32) {
    %c0_i32 = arith.constant 0 : i32
    %c0_i32_0 = arith.constant 0 : i32
    %c0_i32_1 = arith.constant 0 : i32
    return %c0_i32, %c0_i32_0 : i32, i32
  }
  func.func @transform_4(%arg0: i32) -> (i32, i32) {
    %c0_i32 = arith.constant 0 : i32
    %c0_i32_0 = arith.constant 0 : i32
    %c0_i32_1 = arith.constant 0 : i32
    return %c0_i32, %c0_i32_0 : i32, i32
  }
  func.func @transform_5(%arg0: i32) -> (i32, i32) {
    %c0_i32 = arith.constant 0 : i32
    %c0_i32_0 = arith.constant 0 : i32
    %c0_i32_1 = arith.constant 0 : i32
    return %c0_i32, %c0_i32_0 : i32, i32
  }
  func.func @transform_6(%arg0: i32) -> (i32, i32) {
    %c0_i32 = arith.constant 0 : i32
    %c0_i32_0 = arith.constant 0 : i32
    %c0_i32_1 = arith.constant 0 : i32
    return %c0_i32, %c0_i32_0 : i32, i32
  }
  func.func @transform_7(%arg0: i32) -> (i32, i32) {
    %c0_i32 = arith.constant 0 : i32
    %c0_i32_0 = arith.constant 0 : i32
    return %c0_i32, %arg0 : i32, i32
  }
}

</mosaic_0001>

<llo_original>
// kernel: tpu_custom_call.1
$region0: #{tpu_custom_call.1}
  #allocation0 [shape = 'u32[]', space=smem, size = 0x4, offset = 0x4, fixed_abs, tag = 'smem constant byte address 0x4 - core index']
  #allocation1 [shape = 'u32[144,128]{1,0:T(1,128)}', space=vmem, size = 0x12000, scoped, tag = 'internal scratch']
  %s0 = inlined_call_operand.vmem [shape: bf16[8,384], index: 0, kind: input, shape index: {}]
  %s1 = inlined_call_operand.vmem [shape: bf16[64,8], index: 1, kind: input, shape index: {}]
  %s2 = inlined_call_operand.vmem [shape: f32[64,1], index: 2, kind: input, shape index: {}]
  %s3 = inlined_call_operand.vmem [shape: bf16[32,64], index: 3, kind: input, shape index: {}]
  %s4 = inlined_call_operand.vmem [shape: f32[32,1], index: 4, kind: input, shape index: {}]
  %s5 = inlined_call_operand.vmem [shape: bf16[8,32], index: 5, kind: input, shape index: {}]
  %s6 = inlined_call_operand.vmem [shape: f32[8,1], index: 6, kind: input, shape index: {}]
  %s7 = inlined_call_operand.hbm [shape: f32[8,384], index: 7, kind: output, shape index: {}]
  %s8 = sld [smem:[#allocation0]]
  $region61: #{tpu_custom_call.1} parent=0
    _
  %s10 = ssub.s32 1, %s8
  %s11 = scalar_select 0, %s10, %s8
  $region1: #{tpu_custom_call.1} parent=0
    #allocation2 [shape = 'u8[8192]{0}', space=vmem, size = 0x2000, scoped, tag = 'output window, operand 0']
    #allocation3 [shape = 's32[2]{0}', space=sflag, size = 0x8, scoped, tag = 'scoped memory for tpu_custom_call.1']
    %12 = vsyncpa [#allocation3], 0
    %s13 = scalar_lea.sflag [#allocation3], 1
    %14 = vsyncpa %s13, 0
    loop: start=0, step=1, limit=5
    $region2: #{tpu_custom_call.1} parent=1 // loop_pre_header
      _
    $region3: #{tpu_custom_call.1} parent=1 // loop_header
      %s16 = sphi 0, %s20
      %p17 = scmp.ge.s32.totalorder %s16, 5
      %s26 = sphi 0, %s28
      %s29 = sphi 0, %s26
      %s30 = sphi 0, %s29
      %s46 = sphi 0, %s30
      %s50 = sphi 0, %s50
      %s52 = sphi 0, %s50
      %s53 = sphi 0, %s52
      %s67 = sphi 0, %s53
      %s71 = sphi 0, %s71
      %s73 = sphi 0, %s71
      %s74 = sphi 0, %s73
      %s88 = sphi 0, %s74
      %s92 = sphi 0, %s92
      %s94 = sphi 0, %s92
      %s95 = sphi 0, %s94
      %s109 = sphi 0, %s95
      %s113 = sphi 0, %s113
      %s115 = sphi 0, %s113
      %s116 = sphi 0, %s115
      %s130 = sphi 0, %s116
      %s134 = sphi 0, %s134
      %s136 = sphi 0, %s134
      %s137 = sphi 0, %s136
      %s151 = sphi 0, %s137
      %s155 = sphi 0, %s155
      %s157 = sphi 0, %s155
      %s158 = sphi 0, %s157
      %s172 = sphi 0, %s158
      %s178 = sphi 0, %s180
      %s181 = sphi 0, %s178
      %s182 = sphi 0, %s181
      %s198 = sphi 0, %s182
    $region4: #{tpu_custom_call.1} parent=1 // loop_header_branch
      %19 = sbr.rel (%p17) target = $region8
    $region5: #{tpu_custom_call.1} parent=1 // loop_body
      %s21 = ssub.s32 %s16, 1
      %s22 = ssub.s32 %s16, 2
      %s23 = sadd.s32 %s16, 1
      %s24 = ssub.s32 %s16, %s23
      %p25 = scmp.eq.s32.totalorder %s24, 0
      %s27 = sadd.s32 %s26, 1
      %s28 = scalar_select %p25, %s26, %s27
      %p31 = pneg %p25
      %p32 = scmp.eq.s32.totalorder %s16, 2
      %p33 = por %p31, %p32
      %p34 = scmp.ne.s32.totalorder %s26, %s29
      %p35 = scmp.eq.s32.totalorder %s16, 0
      %p36 = por %p34, %p35
      %p37 = scmp.ne.s32.totalorder %s26, %s29
      %p38 = scmp.eq.s32.totalorder %s21, 2
      %p39 = por %p37, %p38
      %p40 = scmp.ne.s32.totalorder %s29, %s30
      %p41 = scmp.eq.s32.totalorder %s21, 0
      %p42 = por %p40, %p41
      %p43 = scmp.ne.s32.totalorder %s29, %s30
      %p44 = scmp.eq.s32.totalorder %s22, 2
      %p45 = por %p43, %p44
      %p47 = scmp.ne.s32.totalorder %s30, %s46
      %p48 = scmp.eq.s32.totalorder %s22, 0
      %p49 = por %p47, %p48
      %s51 = sadd.s32 %s50, 1
      %p54 = scmp.eq.s32.totalorder %s16, 2
      %p55 = scmp.ne.s32.totalorder %s50, %s52
      %p56 = scmp.eq.s32.totalorder %s16, 0
      %p57 = por %p55, %p56
      %p58 = scmp.ne.s32.totalorder %s50, %s52
      %p59 = scmp.eq.s32.totalorder %s21, 2
      %p60 = por %p58, %p59
      %p61 = scmp.ne.s32.totalorder %s52, %s53
      %p62 = scmp.eq.s32.totalorder %s21, 0
      %p63 = por %p61, %p62
      %p64 = scmp.ne.s32.totalorder %s52, %s53
      %p65 = scmp.eq.s32.totalorder %s22, 2
      %p66 = por %p64, %p65
      %p68 = scmp.ne.s32.totalorder %s53, %s67
      %p69 = scmp.eq.s32.totalorder %s22, 0
      %p70 = por %p68, %p69
      %s72 = sadd.s32 %s71, 1
      %p75 = scmp.eq.s32.totalorder %s16, 2
      %p76 = scmp.ne.s32.totalorder %s71, %s73
      %p77 = scmp.eq.s32.totalorder %s16, 0
      %p78 = por %p76, %p77
      %p79 = scmp.ne.s32.totalorder %s71, %s73
      %p80 = scmp.eq.s32.totalorder %s21, 2
      %p81 = por %p79, %p80
      %p82 = scmp.ne.s32.totalorder %s73, %s74
      %p83 = scmp.eq.s32.totalorder %s21, 0
      %p84 = por %p82, %p83
      %p85 = scmp.ne.s32.totalorder %s73, %s74
      %p86 = scmp.eq.s32.totalorder %s22, 2
      %p87 = por %p85, %p86
      %p89 = scmp.ne.s32.totalorder %s74, %s88
      %p90 = scmp.eq.s32.totalorder %s22, 0
      %p91 = por %p89, %p90
      %s93 = sadd.s32 %s92, 1
      %p96 = scmp.eq.s32.totalorder %s16, 2
      %p97 = scmp.ne.s32.totalorder %s92, %s94
      %p98 = scmp.eq.s32.totalorder %s16, 0
      %p99 = por %p97, %p98
      %p100 = scmp.ne.s32.totalorder %s92, %s94
      %p101 = scmp.eq.s32.totalorder %s21, 2
      %p102 = por %p100, %p101
      %p103 = scmp.ne.s32.totalorder %s94, %s95
      %p104 = scmp.eq.s32.totalorder %s21, 0
      %p105 = por %p103, %p104
      %p106 = scmp.ne.s32.totalorder %s94, %s95
      %p107 = scmp.eq.s32.totalorder %s22, 2
      %p108 = por %p106, %p107
      %p110 = scmp.ne.s32.totalorder %s95, %s109
      %p111 = scmp.eq.s32.totalorder %s22, 0
      %p112 = por %p110, %p111
      %s114 = sadd.s32 %s113, 1
      %p117 = scmp.eq.s32.totalorder %s16, 2
      %p118 = scmp.ne.s32.totalorder %s113, %s115
      %p119 = scmp.eq.s32.totalorder %s16, 0
      %p120 = por %p118, %p119
      %p121 = scmp.ne.s32.totalorder %s113, %s115
      %p122 = scmp.eq.s32.totalorder %s21, 2
      %p123 = por %p121, %p122
      %p124 = scmp.ne.s32.totalorder %s115, %s116
      %p125 = scmp.eq.s32.totalorder %s21, 0
      %p126 = por %p124, %p125
      %p127 = scmp.ne.s32.totalorder %s115, %s116
      %p128 = scmp.eq.s32.totalorder %s22, 2
      %p129 = por %p127, %p128
      %p131 = scmp.ne.s32.totalorder %s116, %s130
      %p132 = scmp.eq.s32.totalorder %s22, 0
      %p133 = por %p131, %p132
      %s135 = sadd.s32 %s134, 1
      %p138 = scmp.eq.s32.totalorder %s16, 2
      %p139 = scmp.ne.s32.totalorder %s134, %s136
      %p140 = scmp.eq.s32.totalorder %s16, 0
      %p141 = por %p139, %p140
      %p142 = scmp.ne.s32.totalorder %s134, %s136
      %p143 = scmp.eq.s32.totalorder %s21, 2
      %p144 = por %p142, %p143
      %p145 = scmp.ne.s32.totalorder %s136, %s137
      %p146 = scmp.eq.s32.totalorder %s21, 0
      %p147 = por %p145, %p146
      %p148 = scmp.ne.s32.totalorder %s136, %s137
      %p149 = scmp.eq.s32.totalorder %s22, 2
      %p150 = por %p148, %p149
      %p152 = scmp.ne.s32.totalorder %s137, %s151
      %p153 = scmp.eq.s32.totalorder %s22, 0
      %p154 = por %p152, %p153
      %s156 = sadd.s32 %s155, 1
      %p159 = scmp.eq.s32.totalorder %s16, 2
      %p160 = scmp.ne.s32.totalorder %s155, %s157
      %p161 = scmp.eq.s32.totalorder %s16, 0
      %p162 = por %p160, %p161
      %p163 = scmp.ne.s32.totalorder %s155, %s157
      %p164 = scmp.eq.s32.totalorder %s21, 2
      %p165 = por %p163, %p164
      %p166 = scmp.ne.s32.totalorder %s157, %s158
      %p167 = scmp.eq.s32.totalorder %s21, 0
      %p168 = por %p166, %p167
      %p169 = scmp.ne.s32.totalorder %s157, %s158
      %p170 = scmp.eq.s32.totalorder %s22, 2
      %p171 = por %p169, %p170
      %p173 = scmp.ne.s32.totalorder %s158, %s172
      %p174 = scmp.eq.s32.totalorder %s22, 0
      %p175 = por %p173, %p174
      %s176 = ssub.s32 %s16, %s23
      %p177 = scmp.eq.s32.totalorder %s176, 0
      %s179 = sadd.s32 %s178, 1
      %s180 = scalar_select %p177, %s178, %s179
      %p183 = pneg %p177
      %p184 = scmp.eq.s32.totalorder %s16, 2
      %p185 = por %p183, %p184
      %p186 = scmp.ne.s32.totalorder %s178, %s181
      %p187 = scmp.eq.s32.totalorder %s16, 0
      %p188 = por %p186, %p187
      %p189 = scmp.ne.s32.totalorder %s178, %s181
      %p190 = scmp.eq.s32.totalorder %s21, 2
      %p191 = por %p189, %p190
      %p192 = scmp.ne.s32.totalorder %s181, %s182
      %p193 = scmp.eq.s32.totalorder %s21, 0
      %p194 = por %p192, %p193
      %p195 = scmp.ne.s32.totalorder %s181, %s182
      %p196 = scmp.eq.s32.totalorder %s22, 2
      %p197 = por %p195, %p196
      %p199 = scmp.ne.s32.totalorder %s182, %s198
      %p200 = scmp.eq.s32.totalorder %s22, 0
      %p201 = por %p199, %p200
      %p202 = scmp.le.s32.totalorder 1, %s16
      %p203 = scmp.lt.s32.totalorder %s16, 4
      %p204 = pnand %p202, %p203
      %p205 = pneg %p204
      // Predicated region
      $region9: #{tpu_custom_call.1} parent=5 // pred_check
        _
      $region10: #{tpu_custom_call.1} parent=5 // pred_check_branch
        %207 = sbr.rel (%p204) target = $region12
      $region11: #{tpu_custom_call.1} parent=5 // pred_region
        %s208 = ssub.s32 %s16, 1
        // Predicated region
        $region13: #{tpu_custom_call.1} parent=11 // pred_check
          %p209 = pneg %p63
        $region14: #{tpu_custom_call.1} parent=11 // pred_check_branch
          %211 = sbr.rel (%p209) target = $region16
        $region15: #{tpu_custom_call.1} parent=11 // pred_region
          _
        $region16: #{tpu_custom_call.1} parent=11 // pred_fallthru
          _
        // Predicated region
        $region17: #{tpu_custom_call.1} parent=11 // pred_check
          %p212 = pneg %p84
        $region18: #{tpu_custom_call.1} parent=11 // pred_check_branch
          %214 = sbr.rel (%p212) target = $region20
        $region19: #{tpu_custom_call.1} parent=11 // pred_region
          _
        $region20: #{tpu_custom_call.1} parent=11 // pred_fallthru
          _
        // Predicated region
        $region21: #{tpu_custom_call.1} parent=11 // pred_check
          %p215 = pneg %p105
        $region22: #{tpu_custom_call.1} parent=11 // pred_check_branch
          %217 = sbr.rel (%p215) target = $region24
        $region23: #{tpu_custom_call.1} parent=11 // pred_region
          _
        $region24: #{tpu_custom_call.1} parent=11 // pred_fallthru
          _
        // Predicated region
        $region25: #{tpu_custom_call.1} parent=11 // pred_check
          %p218 = pneg %p126
        $region26: #{tpu_custom_call.1} parent=11 // pred_check_branch
          %220 = sbr.rel (%p218) target = $region28
        $region27: #{tpu_custom_call.1} parent=11 // pred_region
          _
        $region28: #{tpu_custom_call.1} parent=11 // pred_fallthru
          _
        // Predicated region
        $region29: #{tpu_custom_call.1} parent=11 // pred_check
          %p221 = pneg %p147
        $region30: #{tpu_custom_call.1} parent=11 // pred_check_branch
          %223 = sbr.rel (%p221) target = $region32
        $region31: #{tpu_custom_call.1} parent=11 // pred_region
          _
        $region32: #{tpu_custom_call.1} parent=11 // pred_fallthru
          _
        // Predicated region
        $region33: #{tpu_custom_call.1} parent=11 // pred_check
          %p224 = pneg %p168
        $region34: #{tpu_custom_call.1} parent=11 // pred_check_branch
          %226 = sbr.rel (%p224) target = $region36
        $region35: #{tpu_custom_call.1} parent=11 // pred_region
          _
        $region36: #{tpu_custom_call.1} parent=11 // pred_fallthru
          _
      $region12: #{tpu_custom_call.1} parent=5 // pred_fallthru
        _
      %p227 = scmp.lt.s32.totalorder %s16, 3
      // Predicated region
      $region37: #{tpu_custom_call.1} parent=5 // pred_check
        %p228 = pneg %p227
      $region38: #{tpu_custom_call.1} parent=5 // pred_check_branch
        %230 = sbr.rel (%p228) target = $region40
      $region39: #{tpu_custom_call.1} parent=5 // pred_region
        // Predicated region
        $region41: #{tpu_custom_call.1} parent=39 // pred_check
          %p231 = pneg %p36
        $region42: #{tpu_custom_call.1} parent=39 // pred_check_branch
          %233 = sbr.rel (%p231) target = $region44
        $region43: #{tpu_custom_call.1} parent=39 // pred_region
          %p234 = scmp.lt.s32.totalorder %s16, 2
          %s235 = scalar_select %p234, %s16, 2
          %s236 = smul.addr %s235, 4
          %s237 = scalar_lea.vmem %s0, %s236
        $region44: #{tpu_custom_call.1} parent=39 // pred_fallthru
          _
      $region40: #{tpu_custom_call.1} parent=5 // pred_fallthru
        _
      %p238 = scmp.le.s32.totalorder 1, %s16
      %p239 = scmp.lt.s32.totalorder %s16, 4
      %p240 = pnand %p238, %p239
      %p241 = pneg %p240
      // Predicated region
      $region45: #{tpu_custom_call.1} parent=5 // pred_check
        _
      $region46: #{tpu_custom_call.1} parent=5 // pred_check_branch
        %243 = sbr.rel (%p240) target = $region48
      $region47: #{tpu_custom_call.1} parent=5 // pred_region
        %s244 = ssub.s32 %s16, 1
        %p245 = scmp.lt.s32.totalorder %s21, 2
        %s246 = scalar_select %p245, %s21, 2
        %s247 = smul.addr %s246, 4
        %s248 = scalar_lea.vmem %s0, %s247
        %p249 = pneg %p42
        %p250 = pneg %p39
        %p251 = pneg %p63
        %p252 = pneg %p60
        %p253 = pneg %p84
        %p254 = pneg %p81
        %p255 = pneg %p105
        %p256 = pneg %p102
        %p257 = pneg %p126
        %p258 = pneg %p123
        %p259 = pneg %p147
        %p260 = pneg %p144
        %p261 = pneg %p168
        %p262 = pneg %p165
        %p263 = pneg %p194
        %p264 = pneg %p191
        %s265 = sand.u32 %s181, 1
        %s266 = scalar_lea.sflag [#allocation3], %s265
        %s267 = sand.u32 %s181, 1
        %s268 = smul.addr %s267, 8
        %s269 = scalar_lea.vmem [#allocation2], %s268
        %p270 = scmp.lt.s32.totalorder %s21, 2
        %s271 = scalar_select %p270, %s21, 2
        %s272 = smul.addr %s271, 4
        %s273 = scalar_lea.vmem %s0, %s272
        %v275 = vld [vmem:[%s1] sm:$0xf]
        %v276 = vld [vmem:[%s1 + $0x4] sm:$0xf]
        %v277 = vld [vmem:[%s1 + $0x8] sm:$0xf]
        %v278 = vld [vmem:[%s1 + $0xc] sm:$0xf]
        %v279 = vld [vmem:[%s1 + $0x10] sm:$0xf]
        %v280 = vld [vmem:[%s1 + $0x14] sm:$0xf]
        %v281 = vld [vmem:[%s1 + $0x18] sm:$0xf]
        %v282 = vld [vmem:[%s1 + $0x1c] sm:$0xf]
        %v283 = vld [vmem:[%s273] sm:$0xf]
        %v284 = vld [vmem:[%s2] sm:$0xff]
        %v285 = vld [vmem:[%s2 + $0x8] sm:$0xff]
        %v286 = vld [vmem:[%s2 + $0x10] sm:$0xff]
        %v287 = vld [vmem:[%s2 + $0x18] sm:$0xff]
        %v288 = vld [vmem:[%s2 + $0x20] sm:$0xff]
        %v289 = vld [vmem:[%s2 + $0x28] sm:$0xff]
        %v290 = vld [vmem:[%s2 + $0x30] sm:$0xff]
        %v291 = vld [vmem:[%s2 + $0x38] sm:$0xff]
        %293 = vset.pattern.permute.xlu0 0
        %294 = vperm.xlu0 %293, %v284
        %v295 = vpop.permute.xlu0 %294
        %298 = vset.pattern.permute.xlu0 0
        %299 = vperm.xlu0 %298, %v285
        %v300 = vpop.permute.xlu0 %299
        %303 = vset.pattern.permute.xlu0 0
        %304 = vperm.xlu0 %303, %v286
        %v305 = vpop.permute.xlu0 %304
        %308 = vset.pattern.permute.xlu0 0
        %309 = vperm.xlu0 %308, %v287
        %v310 = vpop.permute.xlu0 %309
        %313 = vset.pattern.permute.xlu0 0
        %314 = vperm.xlu0 %313, %v288
        %v315 = vpop.permute.xlu0 %314
        %318 = vset.pattern.permute.xlu0 0
        %319 = vperm.xlu0 %318, %v289
        %v320 = vpop.permute.xlu0 %319
        %323 = vset.pattern.permute.xlu0 0
        %324 = vperm.xlu0 %323, %v290
        %v325 = vpop.permute.xlu0 %324
        %328 = vset.pattern.permute.xlu0 0
        %329 = vperm.xlu0 %328, %v291
        %v330 = vpop.permute.xlu0 %329
        %v340 = vunpack.c.l.b16 %v275
        %v341 = vunpack.c.l.b16 %v276
        %v342 = vunpack.c.l.b16 %v277
        %v343 = vunpack.c.l.b16 %v278
        %v344 = vunpack.c.l.b16 %v279
        %v345 = vunpack.c.l.b16 %v280
        %v346 = vunpack.c.l.b16 %v281
        %v347 = vunpack.c.l.b16 %v282
        %v348 = vpack.c.b16 %v341, %v340
        %v349 = vpack.c.b16 %v343, %v342
        %v350 = vpack.c.b16 %v345, %v344
        %v351 = vpack.c.b16 %v347, %v346
        %vm352 = vcmask 64512
        %v354 = vsel %vm352, %v348, 0
        %v357 = vsel %vm352, %v349, 0
        %v360 = vsel %vm352, %v350, 0
        %v363 = vsel %vm352, %v351, 0
        %vm365 = vcmask 1043456
        %v367 = vsel %vm365, %v283, 0
        %369 = vmatprep.subr.bf16.mxu0 0
        %370 = vmatpush1.bf16.msra.mxu0 %v367
        %371 = vmatprep.subr.bf16.mxu0 0
        %372 = vmatpush1.bf16.msra.mxu0 0
        %373 = vmatprep.subr.bf16.mxu0 0
        %374 = vmatpush1.bf16.msra.mxu0 0
        %375 = vmatprep.subr.bf16.mxu0 0
        %376 = vmatpush1.bf16.msra.mxu0 0
        %377 = vmatprep.subr.bf16.mxu0 0
        %378 = vmatpush1.bf16.msra.mxu0 0
        %379 = vmatprep.subr.bf16.mxu0 0
        %380 = vmatpush1.bf16.msra.mxu0 0
        %381 = vmatprep.subr.bf16.mxu0 0
        %382 = vmatpush1.bf16.msra.mxu0 0
        %383 = vmatprep.subr.bf16.mxu0 0
        %384 = vmatpush1.bf16.msra.mxu0 0
        %385 = vmatprep.subr.bf16.mxu0 0
        %386 = vmatpush1.bf16.msra.mxu0 0
        %387 = vmatprep.subr.bf16.mxu0 0
        %388 = vmatpush1.bf16.msra.mxu0 0
        %389 = vmatprep.subr.bf16.mxu0 0
        %390 = vmatpush1.bf16.msra.mxu0 0
        %391 = vmatprep.subr.bf16.mxu0 0
        %392 = vmatpush1.bf16.msra.mxu0 0
        %393 = vmatprep.subr.bf16.mxu0 0
        %394 = vmatpush1.bf16.msra.mxu0 0
        %395 = vmatprep.subr.bf16.mxu0 0
        %396 = vmatpush1.bf16.msra.mxu0 0
        %397 = vmatprep.subr.bf16.mxu0 0
        %398 = vmatpush1.bf16.msra.mxu0 0
        %399 = vmatprep.subr.bf16.mxu0 0
        %400 = vmatpush1.bf16.msra.mxu0 0
        %401 = vmatprep.mubr.bf16.mxu0 0
        %402 = vmatmul.mubr.bf16.gmra.mrb[0].mxu0 %v354
        %v403 = vpop.f32.mrb[0].mxu0
        %v404 = vadd.f32 %v295, %v403
        %v405 = vpop.f32.mrb[0].mxu0
        %v406 = vpop.f32.mrb[0].mxu0
        %v407 = vadd.f32 %v300, %v406
        %v408 = vpop.f32.mrb[0].mxu0
        %409 = vmatprep.mubr.bf16.mxu0 0
        %410 = vmatmul.mubr.bf16.gmra.mrb[0].mxu0 %v357
        %v411 = vpop.f32.mrb[0].mxu0
        %v412 = vadd.f32 %v305, %v411
        %v413 = vpop.f32.mrb[0].mxu0
        %v414 = vpop.f32.mrb[0].mxu0
        %v415 = vadd.f32 %v310, %v414
        %v416 = vpop.f32.mrb[0].mxu0
        %417 = vmatprep.mubr.bf16.mxu0 0
        %418 = vmatmul.mubr.bf16.gmra.mrb[0].mxu0 %v360
        %v419 = vpop.f32.mrb[0].mxu0
        %v420 = vadd.f32 %v315, %v419
        %v421 = vpop.f32.mrb[0].mxu0
        %v422 = vpop.f32.mrb[0].mxu0
        %v423 = vadd.f32 %v320, %v422
        %v424 = vpop.f32.mrb[0].mxu0
        %425 = vmatprep.mubr.bf16.mxu0 0
        %426 = vmatmul.mubr.bf16.gmra.mrb[0].mxu0 %v363
        %v427 = vpop.f32.mrb[0].mxu0
        %v428 = vadd.f32 %v325, %v427
        %v429 = vpop.f32.mrb[0].mxu0
        %v430 = vpop.f32.mrb[0].mxu0
        %v431 = vadd.f32 %v330, %v430
        %v432 = vpop.f32.mrb[0].mxu0
        %433 = vdwg.mxu0
        %v434 = vmax.f32 %v404, 0.0
        %v435 = vmax.f32 %v407, 0.0
        %v436 = vmax.f32 %v412, 0.0
        %v437 = vmax.f32 %v415, 0.0
        %v438 = vmax.f32 %v420, 0.0
        %v439 = vmax.f32 %v423, 0.0
        %v440 = vmax.f32 %v428, 0.0
        %v441 = vmax.f32 %v431, 0.0
        %v442 = vld [vmem:[%s3] sm:$0xf]
        %v443 = vld [vmem:[%s3 + $0x4] sm:$0xf]
        %v444 = vld [vmem:[%s3 + $0x8] sm:$0xf]
        %v445 = vld [vmem:[%s3 + $0xc] sm:$0xf]
        %v446 = vpack.c.bf16 %v435, %v434
        %v447 = vpack.c.bf16 %v437, %v436
        %v448 = vpack.c.bf16 %v439, %v438
        %v449 = vpack.c.bf16 %v441, %v440
        %v450 = vld [vmem:[%s4] sm:$0xff]
        %v451 = vld [vmem:[%s4 + $0x8] sm:$0xff]
        %v452 = vld [vmem:[%s4 + $0x10] sm:$0xff]
        %v453 = vld [vmem:[%s4 + $0x18] sm:$0xff]
        %455 = vset.pattern.permute.xlu0 0
        %456 = vperm.xlu0 %455, %v450
        %v457 = vpop.permute.xlu0 %456
        %460 = vset.pattern.permute.xlu0 0
        %461 = vperm.xlu0 %460, %v451
        %v462 = vpop.permute.xlu0 %461
        %465 = vset.pattern.permute.xlu0 0
        %466 = vperm.xlu0 %465, %v452
        %v467 = vpop.permute.xlu0 %466
        %470 = vset.pattern.permute.xlu0 0
        %471 = vperm.xlu0 %470, %v453
        %v472 = vpop.permute.xlu0 %471
        %v478 = vunpack.c.l.b16 %v442
        %v479 = vunpack.c.l.b16 %v443
        %v480 = vunpack.c.l.b16 %v444
        %v481 = vunpack.c.l.b16 %v445
        %v482 = vpack.c.b16 %v479, %v478
        %v483 = vpack.c.b16 %v481, %v480
        %vm484 = vcmask 523264
        %v486 = vsel %vm484, %v482, 0
        %v489 = vsel %vm484, %v483, 0
        %491 = vmatprep.subr.bf16.mxu0 0
        %492 = vmatpush1.bf16.msra.mxu0 %v446
        %493 = vmatprep.subr.bf16.mxu0 0
        %494 = vmatpush1.bf16.msra.mxu0 %v447
        %495 = vmatprep.subr.bf16.mxu0 0
        %496 = vmatpush1.bf16.msra.mxu0 %v448
        %497 = vmatprep.subr.bf16.mxu0 0
        %498 = vmatpush1.bf16.msra.mxu0 %v449
        %499 = vmatprep.subr.bf16.mxu0 0
        %500 = vmatpush1.bf16.msra.mxu0 0
        %501 = vmatprep.subr.bf16.mxu0 0
        %502 = vmatpush1.bf16.msra.mxu0 0
        %503 = vmatprep.subr.bf16.mxu0 0
        %504 = vmatpush1.bf16.msra.mxu0 0
        %505 = vmatprep.subr.bf16.mxu0 0
        %506 = vmatpush1.bf16.msra.mxu0 0
        %507 = vmatprep.subr.bf16.mxu0 0
        %508 = vmatpush1.bf16.msra.mxu0 0
        %509 = vmatprep.subr.bf16.mxu0 0
        %510 = vmatpush1.bf16.msra.mxu0 0
        %511 = vmatprep.subr.bf16.mxu0 0
        %512 = vmatpush1.bf16.msra.mxu0 0
        %513 = vmatprep.subr.bf16.mxu0 0
        %514 = vmatpush1.bf16.msra.mxu0 0
        %515 = vmatprep.subr.bf16.mxu0 0
        %516 = vmatpush1.bf16.msra.mxu0 0
        %517 = vmatprep.subr.bf16.mxu0 0
        %518 = vmatpush1.bf16.msra.mxu0 0
        %519 = vmatprep.subr.bf16.mxu0 0
        %520 = vmatpush1.bf16.msra.mxu0 0
        %521 = vmatprep.subr.bf16.mxu0 0
        %522 = vmatpush1.bf16.msra.mxu0 0
        %523 = vmatprep.mubr.bf16.mxu0 0
        %524 = vmatmul.mubr.bf16.gmra.mrb[0].mxu0 %v486
        %v525 = vpop.f32.mrb[0].mxu0
        %v526 = vadd.f32 %v457, %v525
        %v527 = vpop.f32.mrb[0].mxu0
        %v528 = vpop.f32.mrb[0].mxu0
        %v529 = vadd.f32 %v462, %v528
        %v530 = vpop.f32.mrb[0].mxu0
        %531 = vmatprep.mubr.bf16.mxu0 0
        %532 = vmatmul.mubr.bf16.gmra.mrb[0].mxu0 %v489
        %v533 = vpop.f32.mrb[0].mxu0
        %v534 = vadd.f32 %v467, %v533
        %v535 = vpop.f32.mrb[0].mxu0
        %v536 = vpop.f32.mrb[0].mxu0
        %v537 = vadd.f32 %v472, %v536
        %v538 = vpop.f32.mrb[0].mxu0
        %539 = vdwg.mxu0
        %v540 = vmax.f32 %v526, 0.0
        %v541 = vmax.f32 %v529, 0.0
        %v542 = vmax.f32 %v534, 0.0
        %v543 = vmax.f32 %v537, 0.0
        %v544 = vld [vmem:[%s5] sm:$0xf]
        %v545 = vpack.c.bf16 %v541, %v540
        %v546 = vpack.c.bf16 %v543, %v542
        %v547 = vld [vmem:[%s6] sm:$0xff]
        %549 = vset.pattern.permute.xlu0 0
        %550 = vperm.xlu0 %549, %v547
        %v551 = vpop.permute.xlu0 %550
        %vm553 = vcmask 261120
        %v555 = vsel %vm553, %v544, 0
        %557 = vmatprep.subr.bf16.mxu0 0
        %558 = vmatpush1.bf16.msra.mxu0 %v545
        %559 = vmatprep.subr.bf16.mxu0 0
        %560 = vmatpush1.bf16.msra.mxu0 %v546
        %561 = vmatprep.subr.bf16.mxu0 0
        %562 = vmatpush1.bf16.msra.mxu0 0
        %563 = vmatprep.subr.bf16.mxu0 0
        %564 = vmatpush1.bf16.msra.mxu0 0
        %565 = vmatprep.subr.bf16.mxu0 0
        %566 = vmatpush1.bf16.msra.mxu0 0
        %567 = vmatprep.subr.bf16.mxu0 0
        %568 = vmatpush1.bf16.msra.mxu0 0
        %569 = vmatprep.subr.bf16.mxu0 0
        %570 = vmatpush1.bf16.msra.mxu0 0
        %571 = vmatprep.subr.bf16.mxu0 0
        %572 = vmatpush1.bf16.msra.mxu0 0
        %573 = vmatprep.subr.bf16.mxu0 0
        %574 = vmatpush1.bf16.msra.mxu0 0
        %575 = vmatprep.subr.bf16.mxu0 0
        %576 = vmatpush1.bf16.msra.mxu0 0
        %577 = vmatprep.subr.bf16.mxu0 0
        %578 = vmatpush1.bf16.msra.mxu0 0
        %579 = vmatprep.subr.bf16.mxu0 0
        %580 = vmatpush1.bf16.msra.mxu0 0
        %581 = vmatprep.subr.bf16.mxu0 0
        %582 = vmatpush1.bf16.msra.mxu0 0
        %583 = vmatprep.subr.bf16.mxu0 0
        %584 = vmatpush1.bf16.msra.mxu0 0
        %585 = vmatprep.subr.bf16.mxu0 0
        %586 = vmatpush1.bf16.msra.mxu0 0
        %587 = vmatprep.subr.bf16.mxu0 0
        %588 = vmatpush1.bf16.msra.mxu0 0
        %589 = vmatprep.mubr.bf16.mxu0 0
        %590 = vmatmul.mubr.bf16.gmra.mrb[0].mxu0 %v555
        %v591 = vpop.f32.mrb[0].mxu0
        %v592 = vadd.f32 %v551, %v591
        %v593 = vpop.f32.mrb[0].mxu0
        %v594 = vpop.f32.mrb[0].mxu0
        %v595 = vpop.f32.mrb[0].mxu0
        %596 = vdwg.mxu0
        %597 = vst [vmem:[%s269] sm:$0xff] %v592
        %s598 = sand.u32 %s181, 1
        %s599 = scalar_lea.sflag [#allocation3], %s598
        %s600 = sand.u32 %s181, 1
        %s601 = smul.addr %s600, 8
        %s602 = scalar_lea.vmem [#allocation2], %s601
        // Predicated region
        $region49: #{tpu_custom_call.1} parent=47 // pred_check
          %p603 = pneg %p191
        $region50: #{tpu_custom_call.1} parent=47 // pred_check_branch
          %605 = sbr.rel (%p603) target = $region52
        $region51: #{tpu_custom_call.1} parent=47 // pred_region
          %s607 = ssub.s32 128, 128
          %608 = vsyncadd %s599, %s607
          %s609 = smul.addr %s21, 128
          %s610 = scalar_lea.hbm %s7, %s609
          %s612 = sshll.u32 %s602, 4
          %s613 = int_to_ptr.vmem [resolvable:$true] %s612
          %615 = dma.vmem_to_hbm [thread:$0]  %s613, 128, %s610, %s599
        $region52: #{tpu_custom_call.1} parent=47 // pred_fallthru
          _
      $region48: #{tpu_custom_call.1} parent=5 // pred_fallthru
        _
      %p616 = scmp.le.s32.totalorder 2, %s16
      // Predicated region
      $region53: #{tpu_custom_call.1} parent=5 // pred_check
        %p617 = pneg %p616
      $region54: #{tpu_custom_call.1} parent=5 // pred_check_branch
        %619 = sbr.rel (%p617) target = $region56
      $region55: #{tpu_custom_call.1} parent=5 // pred_region
        %s620 = ssub.s32 %s16, 2
        // Predicated region
        $region57: #{tpu_custom_call.1} parent=55 // pred_check
          %p621 = pneg %p197
        $region58: #{tpu_custom_call.1} parent=55 // pred_check_branch
          %623 = sbr.rel (%p621) target = $region60
        $region59: #{tpu_custom_call.1} parent=55 // pred_region
          %s624 = sand.u32 %s182, 1
          %s625 = scalar_lea.sflag [#allocation3], %s624
          %s626 = sand.u32 %s182, 1
          %s627 = smul.addr %s626, 8
          %s628 = scalar_lea.vmem [#allocation2], %s627
          %629 = dma.done %s625, 128
        $region60: #{tpu_custom_call.1} parent=55 // pred_fallthru
          _
      $region56: #{tpu_custom_call.1} parent=5 // pred_fallthru
        _
    $region6: #{tpu_custom_call.1} parent=1 // loop_footer
      %s20 = sadd.s32 1, %s16
    $region7: #{tpu_custom_call.1} parent=1 // loop_footer_branch
      %15 = sbr.rel target = $region3
    $region8: #{tpu_custom_call.1} parent=1 // loop_exit
      _
    %630 = vsyncpa [#allocation3], 1
    %s631 = scalar_lea.sflag [#allocation3], 1
    %632 = vsyncpa %s631, 1

</llo_original>
